<compile_context>
chip_gen: v5e
topology: v5e:2x2
jax: 0.10.0
libtpu: 0.0.40
codegen_flags: <defaults>
</compile_context>

<pallas_src>
import functools

import jax
import jax.numpy as jnp
import numpy as np
from jax.experimental import pallas as pl
from jax.experimental.pallas import tpu as pltpu

NUM_HINGES = 5
NUM_EACH_SIDE = (NUM_HINGES + 1) // 2
HINGES = tuple(float(h) for h in np.linspace(0.0, 2.5, NUM_EACH_SIDE))

_LANES = 128
_SUBLANES = 8


def _splash_kernel(cr_ref, cl_ref, bias_ref, x_ref, o_ref):
    """Elementwise SPLASH on a (row_tile, 128) tile.

    cr_ref, cl_ref: (NUM_EACH_SIDE,) f32 in SMEM; bias_ref: (1,) f32 in SMEM.
    Math is done in f32 regardless of the storage dtype of x/o (matches the
    PyTorch reference, whose f32 parameters promote the whole expression).
    """
    x = x_ref[...].astype(jnp.float32)

    # Right hinges: sum_i cr[i] * max(x - h_i, 0).
    # HINGES[0] == 0.0 -> plain ReLU; it doubles as the accumulator init.
    out = cr_ref[0] * jnp.maximum(x, 0.0)
    for idx in range(1, NUM_EACH_SIDE):
        out = out + cr_ref[idx] * jnp.maximum(x - HINGES[idx], 0.0)

    # Left hinges: cl[i] * max(-x - h_i, 0) == (-cl[i]) * min(x + h_i, 0).
    # Exact rewrite (sign flips are exact), saves the vector negate of x.
    out = out + (-cl_ref[0]) * jnp.minimum(x, 0.0)
    for idx in range(1, NUM_EACH_SIDE):
        out = out + (-cl_ref[idx]) * jnp.minimum(x + HINGES[idx], 0.0)

    o_ref[...] = (out + bias_ref[0]).astype(o_ref.dtype)


@functools.lru_cache(maxsize=1)
def _chip_config():
    """(block_byte_budget, num_tensorcores, vmem_limit_bytes) for this chip."""
    kind = ""
    try:
        dev = jax.devices()[0]
        if dev.platform == "tpu":
            kind = (getattr(dev, "device_kind", "") or "").lower()
    except Exception:  # pragma: no cover - defensive, fall through to default
        kind = ""

    if "v7" in kind:                       # 2 TCs, 64 MiB physical VMEM
        cfg = (4 << 20, 2, 48 << 20)
    elif "v6" in kind:                     # 1 TC, 128 MiB physical VMEM
        cfg = (4 << 20, 1, 64 << 20)
    elif "v5p" in kind or kind == "tpu v5":  # megacore
        cfg = (4 << 20, 2, 64 << 20)
    elif "v5 lite" in kind or "v5e" in kind:
        cfg = (2 << 20, 1, 48 << 20)
    elif "v4" in kind:                     # megacore
        cfg = (2 << 20, 2, 48 << 20)
    else:
        cfg = (2 << 20, 1, 32 << 20)

    block_bytes, num_tc, vmem_limit = cfg
    try:
        cap = pltpu.get_tpu_info().vmem_capacity_bytes
        vmem_limit = min(vmem_limit, int(cap * 3 // 4))
    except Exception:
        pass
    return block_bytes, num_tc, vmem_limit


def _pick_row_tile(rows: int, itemsize: int, block_bytes: int, num_tc: int) -> int:
    """Rows per grid step.

    Big enough to amortize per-step overhead (target ~block_bytes per input
    block), no forced splitting on single-TC chips, and a balanced >=num_tc
    step grid on multi-TC chips so each TensorCore streams similar work.
    """
    max_tile = max(_SUBLANES,
                   (block_bytes // (_LANES * itemsize)) // _SUBLANES * _SUBLANES)
    steps = pl.cdiv(rows, max_tile)
    if num_tc > 1 and rows > _SUBLANES:
        # TODO(synk): verify via xprof that dimension_semantics=("parallel",)
        # shards this axis across both TensorCores on v7x.
        steps = num_tc * pl.cdiv(max(steps, num_tc), num_tc)
    tile = _SUBLANES * pl.cdiv(pl.cdiv(rows, steps), _SUBLANES)
    if tile >= rows:
        tile = rows  # single step; a full-extent block dim is always legal
    return tile


@functools.partial(jax.jit, static_argnames=("donate_x",))
def splash_forward(x, coeffs_right, coeffs_left, output_bias, *, donate_x=False):
    """SPLASH activation. x may have any shape (e.g. NCHW); result matches it."""
    orig_shape = x.shape
    orig_dtype = x.dtype

    flat = x.reshape(-1)  # keep original dtype through the kernel
    n = flat.shape[0]
    rem = n % _LANES
    if rem:
        # TODO(synk): the <128-element ragged tail still costs one pad + one
        # slice HBM pass; lane-aligned inputs (the common case) pay nothing.
        flat = jnp.pad(flat, (0, _LANES - rem))
    rows = flat.shape[0] // _LANES
    x2d = flat.reshape(rows, _LANES)

    block_bytes, num_tc, vmem_limit = _chip_config()
    row_tile = _pick_row_tile(rows, int(x2d.dtype.itemsize), block_bytes, num_tc)
    grid = (pl.cdiv(rows, row_tile),)

    out2d = pl.pallas_call(
        _splash_kernel,
        out_shape=jax.ShapeDtypeStruct((rows, _LANES), orig_dtype),
        grid=grid,
        in_specs=[
            pl.BlockSpec(memory_space=pltpu.SMEM),  # coeffs_right
            pl.BlockSpec(memory_space=pltpu.SMEM),  # coeffs_left
            pl.BlockSpec(memory_space=pltpu.SMEM),  # output_bias
            pl.BlockSpec((row_tile, _LANES), lambda i: (i, 0)),
        ],
        out_specs=pl.BlockSpec((row_tile, _LANES), lambda i: (i, 0)),
        input_output_aliases=({3: 0} if donate_x else {}),
        compiler_params=pltpu.CompilerParams(
            dimension_semantics=("parallel",),
            vmem_limit_bytes=vmem_limit),
    )(
        coeffs_right.astype(jnp.float32),
        coeffs_left.astype(jnp.float32),
        output_bias.astype(jnp.float32),
        x2d,
    )

    out = out2d.reshape(-1)
    if rem:
        out = out[:n]
    return out.reshape(orig_shape)


def splash_reference(x, coeffs_right, coeffs_left, output_bias):
    """Pure-JAX reference mirroring the PyTorch forward pass."""
    xf = x.astype(jnp.float32)
    out = jnp.zeros_like(xf)
    for idx in range(NUM_EACH_SIDE):
        out = out + coeffs_right[idx] * jnp.maximum(xf - HINGES[idx], 0.0)
    for idx in range(NUM_EACH_SIDE):
        out = out + coeffs_left[idx] * jnp.maximum(-xf - HINGES[idx], 0.0)
    return (out + output_bias[0]).astype(x.dtype)


if __name__ == "__main__":
    key = jax.random.PRNGKey(0)
    kx, kr, kl, kb, kx2 = jax.random.split(key, 5)

    # SPLASH "RELU" init + small deterministic perturbation so every hinge
    # term contributes.
    coeffs_right = (jnp.concatenate([jnp.ones(1), jnp.zeros(NUM_EACH_SIDE - 1)])
                    + 0.05 * jax.random.normal(kr, (NUM_EACH_SIDE,)))
    coeffs_left = (jnp.zeros(NUM_EACH_SIDE)
                   + 0.05 * jax.random.normal(kl, (NUM_EACH_SIDE,)))
    output_bias = 0.05 * jax.random.normal(kb, (1,))

    # 1) NCHW f32 input (lane-aligned -> zero-pad path).
    x = jax.random.normal(kx, (2, 4, 16, 16), dtype=jnp.float32) * 2.0
    out = jax.block_until_ready(
        splash_forward(x, coeffs_right, coeffs_left, output_bias))
    ref = splash_reference(x, coeffs_right, coeffs_left, output_bias)
    np.testing.assert_allclose(np.asarray(out), np.asarray(ref),
                               rtol=1e-6, atol=1e-6)
    assert out.shape == x.shape and out.dtype == x.dtype

    # 1b) Same input through the in-place (aliased-output) path.
    out_alias = jax.block_until_ready(
        splash_forward(x, coeffs_right, coeffs_left, output_bias, donate_x=True))
    np.testing.assert_allclose(np.asarray(out_alias), np.asarray(ref),
                               rtol=1e-6, atol=1e-6)

    # 2) Odd-sized bf16 input (exercises the ragged-tail path and the
    #    in-kernel dtype cast; storage stays bf16 end-to-end).
    x2 = (jax.random.normal(kx2, (3, 5, 7, 11), dtype=jnp.float32) * 2.0
          ).astype(jnp.bfloat16)
    out2 = jax.block_until_ready(
        splash_forward(x2, coeffs_right, coeffs_left, output_bias))
    ref2 = splash_reference(x2, coeffs_right, coeffs_left, output_bias)
    np.testing.assert_allclose(np.asarray(out2, dtype=np.float32),
                               np.asarray(ref2, dtype=np.float32),
                               rtol=2e-2, atol=2e-2)
    assert out2.shape == x2.shape and out2.dtype == x2.dtype

    print("KERNEL_OK")
</pallas_src>

<mosaic_0001>
module attributes {stable_mosaic.version = 11 : i64} {
  func.func @_splash_kernel(%arg0: i32, %arg1: memref<3xf32, #tpu.memory_space<smem>>, %arg2: memref<3xf32, #tpu.memory_space<smem>>, %arg3: memref<1xf32, #tpu.memory_space<smem>>, %arg4: memref<16x128xf32, #tpu.memory_space<vmem>>, %arg5: memref<16x128xf32, #tpu.memory_space<vmem>>) attributes {dimension_semantics = [#tpu.dimension_semantics<parallel>], iteration_bounds = array<i64: 1>, scalar_prefetch = 0 : i64, scratch_operands = 0 : i64, tpu.core_type = #tpu.core_type<tc>, window_params = [{transform_indices = @transform_0, window_bounds = array<i64: 3>}, {transform_indices = @transform_1, window_bounds = array<i64: 3>}, {transform_indices = @transform_2, window_bounds = array<i64: 1>}, {transform_indices = @transform_3, window_bounds = array<i64: 16, 128>}, {transform_indices = @transform_4, window_bounds = array<i64: 16, 128>}]} {
    %c0 = arith.constant 0 : index
    %c0_0 = arith.constant 0 : index
    %0 = vector.load %arg4[%c0, %c0_0] : memref<16x128xf32, #tpu.memory_space<vmem>>, vector<16x128xf32>
    %c0_1 = arith.constant 0 : index
    %1 = memref.load %arg1[%c0_1] : memref<3xf32, #tpu.memory_space<smem>>
    %cst = arith.constant 0.000000e+00 : f32
    %2 = vector.broadcast %cst : f32 to vector<16x128xf32>
    %3 = arith.maximumf %0, %2 : vector<16x128xf32>
    %4 = vector.broadcast %1 : f32 to vector<16x128xf32>
    %5 = arith.mulf %4, %3 : vector<16x128xf32>
    %c1 = arith.constant 1 : index
    %6 = memref.load %arg1[%c1] : memref<3xf32, #tpu.memory_space<smem>>
    %cst_2 = arith.constant 1.250000e+00 : f32
    %7 = vector.broadcast %cst_2 : f32 to vector<16x128xf32>
    %8 = arith.subf %0, %7 : vector<16x128xf32>
    %cst_3 = arith.constant 0.000000e+00 : f32
    %9 = vector.broadcast %cst_3 : f32 to vector<16x128xf32>
    %10 = arith.maximumf %8, %9 : vector<16x128xf32>
    %11 = vector.broadcast %6 : f32 to vector<16x128xf32>
    %12 = arith.mulf %11, %10 : vector<16x128xf32>
    %13 = arith.addf %5, %12 : vector<16x128xf32>
    %c2 = arith.constant 2 : index
    %14 = memref.load %arg1[%c2] : memref<3xf32, #tpu.memory_space<smem>>
    %cst_4 = arith.constant 2.500000e+00 : f32
    %15 = vector.broadcast %cst_4 : f32 to vector<16x128xf32>
    %16 = arith.subf %0, %15 : vector<16x128xf32>
    %cst_5 = arith.constant 0.000000e+00 : f32
    %17 = vector.broadcast %cst_5 : f32 to vector<16x128xf32>
    %18 = arith.maximumf %16, %17 : vector<16x128xf32>
    %19 = vector.broadcast %14 : f32 to vector<16x128xf32>
    %20 = arith.mulf %19, %18 : vector<16x128xf32>
    %21 = arith.addf %13, %20 : vector<16x128xf32>
    %c0_6 = arith.constant 0 : index
    %22 = memref.load %arg2[%c0_6] : memref<3xf32, #tpu.memory_space<smem>>
    %cst_7 = arith.constant 0.000000e+00 : f32
    %23 = arith.subf %cst_7, %22 : f32
    %cst_8 = arith.constant 0.000000e+00 : f32
    %24 = vector.broadcast %cst_8 : f32 to vector<16x128xf32>
    %25 = arith.minimumf %0, %24 : vector<16x128xf32>
    %26 = vector.broadcast %23 : f32 to vector<16x128xf32>
    %27 = arith.mulf %26, %25 : vector<16x128xf32>
    %28 = arith.addf %21, %27 : vector<16x128xf32>
    %c1_9 = arith.constant 1 : index
    %29 = memref.load %arg2[%c1_9] : memref<3xf32, #tpu.memory_space<smem>>
    %cst_10 = arith.constant 0.000000e+00 : f32
    %30 = arith.subf %cst_10, %29 : f32
    %cst_11 = arith.constant 1.250000e+00 : f32
    %31 = vector.broadcast %cst_11 : f32 to vector<16x128xf32>
    %32 = arith.addf %0, %31 : vector<16x128xf32>
    %cst_12 = arith.constant 0.000000e+00 : f32
    %33 = vector.broadcast %cst_12 : f32 to vector<16x128xf32>
    %34 = arith.minimumf %32, %33 : vector<16x128xf32>
    %35 = vector.broadcast %30 : f32 to vector<16x128xf32>
    %36 = arith.mulf %35, %34 : vector<16x128xf32>
    %37 = arith.addf %28, %36 : vector<16x128xf32>
    %c2_13 = arith.constant 2 : index
    %38 = memref.load %arg2[%c2_13] : memref<3xf32, #tpu.memory_space<smem>>
    %cst_14 = arith.constant 0.000000e+00 : f32
    %39 = arith.subf %cst_14, %38 : f32
    %cst_15 = arith.constant 2.500000e+00 : f32
    %40 = vector.broadcast %cst_15 : f32 to vector<16x128xf32>
    %41 = arith.addf %0, %40 : vector<16x128xf32>
    %cst_16 = arith.constant 0.000000e+00 : f32
    %42 = vector.broadcast %cst_16 : f32 to vector<16x128xf32>
    %43 = arith.minimumf %41, %42 : vector<16x128xf32>
    %44 = vector.broadcast %39 : f32 to vector<16x128xf32>
    %45 = arith.mulf %44, %43 : vector<16x128xf32>
    %46 = arith.addf %37, %45 : vector<16x128xf32>
    %c0_17 = arith.constant 0 : index
    %47 = memref.load %arg3[%c0_17] : memref<1xf32, #tpu.memory_space<smem>>
    %48 = vector.broadcast %47 : f32 to vector<16x128xf32>
    %49 = arith.addf %46, %48 : vector<16x128xf32>
    %c0_18 = arith.constant 0 : index
    %c0_19 = arith.constant 0 : index
    %50 = vector.load %arg5[%c0_18, %c0_19] : memref<16x128xf32, #tpu.memory_space<vmem>>, vector<16x128xf32>
    tpu.vector_store %arg5[%c0_18, %c0_19], %49 {strides = array<i32>} : memref<16x128xf32, #tpu.memory_space<vmem>>, vector<16x128xf32>,
    return
  }
  func.func @transform_0(%arg0: i32) -> i32 {
    %c0_i32 = arith.constant 0 : i32
    %c0_i32_0 = arith.constant 0 : i32
    return %c0_i32 : i32
  }
  func.func @transform_1(%arg0: i32) -> i32 {
    %c0_i32 = arith.constant 0 : i32
    %c0_i32_0 = arith.constant 0 : i32
    return %c0_i32 : i32
  }
  func.func @transform_2(%arg0: i32) -> i32 {
    %c0_i32 = arith.constant 0 : i32
    %c0_i32_0 = arith.constant 0 : i32
    return %c0_i32 : i32
  }
  func.func @transform_3(%arg0: i32) -> (i32, i32) {
    %c0_i32 = arith.constant 0 : i32
    %c0_i32_0 = arith.constant 0 : i32
    return %arg0, %c0_i32 : i32, i32
  }
  func.func @transform_4(%arg0: i32) -> (i32, i32) {
    %c0_i32 = arith.constant 0 : i32
    %c0_i32_0 = arith.constant 0 : i32
    return %arg0, %c0_i32 : i32, i32
  }
}

</mosaic_0001>

<llo_original>
// kernel: splash_forward.1
$region0: #{splash_forward.1}
  #allocation0 [shape = 'u32[]', space=smem, size = 0x4, offset = 0x4, fixed_abs, tag = 'smem constant byte address 0x4 - core index']
  #allocation1 [shape = 'u32[72,128]{1,0:T(1,128)}', space=vmem, size = 0x9000, scoped, tag = 'internal scratch']
  #allocation2 [shape = 'f32[1]{0:T(128)S(6)}', space=smem, size = 0x200, scoped, tag = 'scoped memory for splash_forward.1']
  %s0 = inlined_call_operand.vmem [shape: f32[3], index: 0, kind: input, shape index: {}]
  %s1 = inlined_call_operand.vmem [shape: f32[3], index: 1, kind: input, shape index: {}]
  %s2 = inlined_call_operand.<no memory space> [shape: f32[1], index: 2, kind: input, shape index: {}]
  %s3 = inlined_call_operand.vmem [shape: f32[16,128], index: 3, kind: input, shape index: {}]
  %s4 = inlined_call_operand.vmem [shape: f32[16,128], index: 4, kind: output, shape index: {}]
  %s5 = sld [smem:[#allocation0]]
  $region34: #{splash_forward.1} parent=0
    _
  %s7 = ssub.s32 1, %s5
  %s8 = scalar_select 0, %s7, %s5
  %9 = sst [smem:[#allocation2]] %s2
  $region1: #{splash_forward.1} parent=0
    #allocation3 [shape = 'u8[512]{0}', space=smem, size = 0x200, scoped, tag = 'input window, operand 0, single buffered']
    #allocation4 [shape = 's32[1]{0}', space=sflag, size = 0x4, scoped, tag = 'scoped memory for splash_forward.1']
    #allocation5 [shape = 'u8[512]{0}', space=smem, size = 0x200, scoped, tag = 'input window, operand 1, single buffered']
    #allocation6 [shape = 's32[1]{0}', space=sflag, size = 0x4, scoped, tag = 'scoped memory for splash_forward.1']
    %10 = vsyncpa [#allocation4], 0
    %11 = vsyncpa [#allocation6], 0
    // Predicated region
    $region2: #{splash_forward.1} parent=1 // pred_check
      _
    $region3: #{splash_forward.1} parent=1 // pred_check_branch
      %13 = sbr.rel (0) target = $region5
    $region4: #{splash_forward.1} parent=1 // pred_region
      %15 = vsyncadd [#allocation4], 0
      %s17 = sshll.u32 %s0, 4
      %s18 = int_to_ptr.vmem [resolvable:$true] %s17
      %20 = dma.vmem_to_smem %s18, 16, [#allocation3], [#allocation4]
    $region5: #{splash_forward.1} parent=1 // pred_fallthru
      _
    // Predicated region
    $region6: #{splash_forward.1} parent=1 // pred_check
      _
    $region7: #{splash_forward.1} parent=1 // pred_check_branch
      %22 = sbr.rel (0) target = $region9
    $region8: #{splash_forward.1} parent=1 // pred_region
      %24 = vsyncadd [#allocation6], 0
      %s26 = sshll.u32 %s1, 4
      %s27 = int_to_ptr.vmem [resolvable:$true] %s26
      %29 = dma.vmem_to_smem %s27, 16, [#allocation5], [#allocation6]
    $region9: #{splash_forward.1} parent=1 // pred_fallthru
      _
    // Predicated region
    $region10: #{splash_forward.1} parent=1 // pred_check
      _
    $region11: #{splash_forward.1} parent=1 // pred_check_branch
      %31 = sbr.rel (0) target = $region13
    $region12: #{splash_forward.1} parent=1 // pred_region
      _
    $region13: #{splash_forward.1} parent=1 // pred_fallthru
      _
    // Predicated region
    $region14: #{splash_forward.1} parent=1 // pred_check
      _
    $region15: #{splash_forward.1} parent=1 // pred_check_branch
      %33 = sbr.rel (0) target = $region17
    $region16: #{splash_forward.1} parent=1 // pred_region
      _
    $region17: #{splash_forward.1} parent=1 // pred_fallthru
      _
    // Predicated region
    $region18: #{splash_forward.1} parent=1 // pred_check
      _
    $region19: #{splash_forward.1} parent=1 // pred_check_branch
      %35 = sbr.rel (0) target = $region21
    $region20: #{splash_forward.1} parent=1 // pred_region
      %37 = dma.done [#allocation4], 16
    $region21: #{splash_forward.1} parent=1 // pred_fallthru
      _
    // Predicated region
    $region22: #{splash_forward.1} parent=1 // pred_check
      _
    $region23: #{splash_forward.1} parent=1 // pred_check_branch
      %39 = sbr.rel (0) target = $region25
    $region24: #{splash_forward.1} parent=1 // pred_region
      %41 = dma.done [#allocation6], 16
    $region25: #{splash_forward.1} parent=1 // pred_fallthru
      _
    %42 = sfence
    %v43 = vld [vmem:[%s3] sm:$0xff]
    %v44 = vld [vmem:[%s3 + $0x8] sm:$0xff]
    %s45 = sld [smem:[#allocation3]]
    %v46 = vmax.f32 %v43, 0.0
    %v47 = vmax.f32 %v44, 0.0
    %v48 = vstv %s45
    %v49 = vmul.f32 %v48, %v46
    %v50 = vmul.f32 %v48, %v47
    %s51 = sld [smem:[#allocation3 + $0x1]]
    %v52 = vsub.f32 %v43, 1.25
    %v53 = vsub.f32 %v44, 1.25
    %v54 = vmax.f32 %v52, 0.0
    %v55 = vmax.f32 %v53, 0.0
    %v56 = vstv %s51
    %v57 = vmul.f32 %v56, %v54
    %v58 = vmul.f32 %v56, %v55
    %v59 = vadd.f32 %v49, %v57
    %v60 = vadd.f32 %v50, %v58
    %s61 = sld [smem:[#allocation3 + $0x2]]
    %v62 = vsub.f32 %v43, 2.5
    %v63 = vsub.f32 %v44, 2.5
    %v64 = vmax.f32 %v62, 0.0
    %v65 = vmax.f32 %v63, 0.0
    %v66 = vstv %s61
    %v67 = vmul.f32 %v66, %v64
    %v68 = vmul.f32 %v66, %v65
    %v69 = vadd.f32 %v59, %v67
    %v70 = vadd.f32 %v60, %v68
    %s71 = sld [smem:[#allocation5]]
    %s72 = ssub.f32 0.0, %s71
    %v73 = vmin.f32 %v43, 0.0
    %v74 = vmin.f32 %v44, 0.0
    %v75 = vstv %s72
    %v76 = vmul.f32 %v75, %v73
    %v77 = vmul.f32 %v75, %v74
    %v78 = vadd.f32 %v69, %v76
    %v79 = vadd.f32 %v70, %v77
    %s80 = sld [smem:[#allocation5 + $0x1]]
    %s81 = ssub.f32 0.0, %s80
    %v82 = vadd.f32 %v43, 1.25
    %v83 = vadd.f32 %v44, 1.25
    %v84 = vmin.f32 %v82, 0.0
    %v85 = vmin.f32 %v83, 0.0
    %v86 = vstv %s81
    %v87 = vmul.f32 %v86, %v84
    %v88 = vmul.f32 %v86, %v85
    %v89 = vadd.f32 %v78, %v87
    %v90 = vadd.f32 %v79, %v88
    %s91 = sld [smem:[#allocation5 + $0x2]]
    %s92 = ssub.f32 0.0, %s91
    %v93 = vadd.f32 %v43, 2.5
    %v94 = vadd.f32 %v44, 2.5
    %v95 = vmin.f32 %v93, 0.0
    %v96 = vmin.f32 %v94, 0.0
    %v97 = vstv %s92
    %v98 = vmul.f32 %v97, %v95
    %v99 = vmul.f32 %v97, %v96
    %v100 = vadd.f32 %v89, %v98
    %v101 = vadd.f32 %v90, %v99
    %s102 = sld [smem:[#allocation2]]
    %v103 = vstv %s102
    %v104 = vadd.f32 %v100, %v103
    %v105 = vadd.f32 %v101, %v103
    %106 = vst [vmem:[%s4] sm:$0xff] %v104
    %107 = vst [vmem:[%s4 + $0x8] sm:$0xff] %v105
    // Predicated region
    $region26: #{splash_forward.1} parent=1 // pred_check
      _
    $region27: #{splash_forward.1} parent=1 // pred_check_branch
      %109 = sbr.rel (0) target = $region29
    $region28: #{splash_forward.1} parent=1 // pred_region
      _
    $region29: #{splash_forward.1} parent=1 // pred_fallthru
      _
    // Predicated region
    $region30: #{splash_forward.1} parent=1 // pred_check
      _
    $region31: #{splash_forward.1} parent=1 // pred_check_branch
      %111 = sbr.rel (0) target = $region33
    $region32: #{splash_forward.1} parent=1 // pred_region
      _
    $region33: #{splash_forward.1} parent=1 // pred_fallthru
      _
    %112 = vsyncpa [#allocation4], 1
    %113 = vsyncpa [#allocation6], 1

</llo_original>
